<compile_context>
chip_gen: v5e
topology: v5e:2x2
jax: 0.10.0
libtpu: 0.0.40
codegen_flags: <defaults>
</compile_context>

<pallas_src>
import functools
import math

import jax
import jax.numpy as jnp
import numpy as np
from jax.experimental import pallas as pl
from jax.experimental.pallas import tpu as pltpu

# ~2 MiB of f32 per input block.  With 2 inputs x 2 pipeline buffers + the f32
# accumulator this is ~10 MiB of VMEM, under the scoped-VMEM defaults on
# v5e (16 MiB) and v6e/v7x (32 MiB); we still raise the limit to 32 MiB for
# headroom, which is safe on all three generations.
_DEFAULT_BLOCK_ELEMS = 512 * 1024
_VMEM_LIMIT_BYTES = 32 * 1024 * 1024


# ------------------------------------------------------------------
# Kernels
# ------------------------------------------------------------------
def _l1_reduce_kernel(pred_ref, tgt_ref, out_ref, acc_ref, *,
                      valid_rows, row_tile, mask_rows):
    """Accumulate |pred - target| into a full-block VMEM accumulator.

    The cross-lane/sublane reduction to a scalar happens once, on the last
    grid step, and is written to the (1, 1) SMEM output.
    """
    i = pl.program_id(0)

    @pl.when(i == 0)
    def _():
        acc_ref[...] = jnp.zeros_like(acc_ref)

    diff = jnp.abs(pred_ref[...].astype(jnp.float32)
                   - tgt_ref[...].astype(jnp.float32))
    if mask_rows:
        # The last block may extend past the real rows; out-of-bounds reads
        # are unspecified, so zero those rows before accumulating.
        row_ids = i * row_tile + jax.lax.broadcasted_iota(
            jnp.int32, diff.shape, 0)
        diff = jnp.where(row_ids < valid_rows, diff, 0.0)

    acc_ref[...] += diff            # pure VPU elementwise work per step

    @pl.when(i == pl.num_programs(0) - 1)
    def _():
        out_ref[0, 0] = jnp.sum(acc_ref[...])


def _l1_rowwise_kernel(pred_ref, tgt_ref, out_ref):
    """Per-row L1 sums emitted as a lane-dense (1, row_tile) output row.

    out[0, j] = sum_k |pred[j, k] - target[j, k]|, computed as an MXU matmul
    of a ones row vector against diff with contraction over the feature axis
    (same "A @ B.T" pattern as q @ k.T), so no (row_tile, 1) column output and
    no masked single-lane stores are needed.
    """
    diff = jnp.abs(pred_ref[...].astype(jnp.float32)
                   - tgt_ref[...].astype(jnp.float32))
    ones = jnp.ones((1, diff.shape[1]), jnp.float32)
    out_ref[...] = jax.lax.dot_general(
        ones, diff,
        dimension_numbers=(((1,), (1,)), ((), ())),
        preferred_element_type=jnp.float32)


# ------------------------------------------------------------------
# Wrapper helpers
# ------------------------------------------------------------------
def _lane_dense_rows(r, d):
    """Free (row-major) regrouping of (r, d) into a lane-dense (r//g, d*g).

    Row boundaries are irrelevant for a global sum, so we regroup rows so the
    last axis becomes a multiple of 128 whenever the regroup is an exact,
    copy-free reshape.  Otherwise fall back to the natural (r, d) view.
    """
    g = 128 // math.gcd(d, 128)
    if g > 1 and r % g == 0:
        return r // g, d * g
    return r, d


def _pick_reduce_tile(num_rows, width, block_elems):
    tile = max(8, (block_elems // max(width, 1)) // 8 * 8)
    return num_rows if tile >= num_rows else tile


def _pick_rowwise_tile(num_rows, width, block_elems):
    tile = max(128, (block_elems // max(width, 1)) // 128 * 128)
    return num_rows if tile >= num_rows else tile


# ------------------------------------------------------------------
# Public entry point
# ------------------------------------------------------------------
@functools.partial(jax.jit, static_argnames=("reduction", "block_elems"))
def final_prediction_l1_loss(pred, target, reduction: str = "mean",
                             block_elems: int = _DEFAULT_BLOCK_ELEMS):
    if reduction not in ("mean", "sum", "none"):
        raise ValueError(f"{reduction} is not a valid value for reduction")

    out_dtype = jnp.promote_types(pred.dtype, target.dtype)
    lead_shape = pred.shape[:-1]
    d = pred.shape[-1]
    r = 1
    for s in lead_shape:
        r *= s

    if reduction in ("mean", "sum"):
        # Global sum of |diff|: row identity does not matter, so use the most
        # lane-dense free view of the data.
        rr, dd = _lane_dense_rows(r, d)
        p2 = pred.reshape(rr, dd)      # free row-major reshape, no HBM copy
        t2 = target.reshape(rr, dd)
        row_tile = _pick_reduce_tile(rr, dd, block_elems)
        grid = (pl.cdiv(rr, row_tile),)
        kernel = functools.partial(
            _l1_reduce_kernel,
            valid_rows=rr, row_tile=row_tile,
            mask_rows=(rr % row_tile != 0))
        # TODO(synk): on v7x, split this sequential reduction across the 2
        # TensorCores (leading parallel grid axis with per-core partials) for
        # ~2x; kept single-core here for portability/robustness.
        total = pl.pallas_call(
            kernel,
            out_shape=jax.ShapeDtypeStruct((1, 1), jnp.float32),
            grid_spec=pltpu.PrefetchScalarGridSpec(
                num_scalar_prefetch=0,
                grid=grid,
                in_specs=[
                    pl.BlockSpec((row_tile, dd), lambda i: (i, 0)),
                    pl.BlockSpec((row_tile, dd), lambda i: (i, 0)),
                ],
                out_specs=pl.BlockSpec(memory_space=pltpu.SMEM),
                scratch_shapes=[pltpu.VMEM((row_tile, dd), jnp.float32)],
            ),
            compiler_params=pltpu.CompilerParams(
                dimension_semantics=("arbitrary",),
                vmem_limit_bytes=_VMEM_LIMIT_BYTES),
        )(p2, t2)
        total = total[0, 0]
        if reduction == "mean":
            total = total / jnp.float32(r)
        return total.astype(out_dtype)

    # reduction == 'none': per-row L1 sums.
    p2 = pred.reshape(r, d)            # free reshape
    t2 = target.reshape(r, d)
    row_tile = _pick_rowwise_tile(r, d, block_elems)
    grid = (pl.cdiv(r, row_tile),)
    rowwise = pl.pallas_call(
        _l1_rowwise_kernel,
        out_shape=jax.ShapeDtypeStruct((1, r), jnp.float32),
        grid_spec=pltpu.PrefetchScalarGridSpec(
            num_scalar_prefetch=0,
            grid=grid,
            in_specs=[
                pl.BlockSpec((row_tile, d), lambda i: (i, 0)),
                pl.BlockSpec((row_tile, d), lambda i: (i, 0)),
            ],
            out_specs=pl.BlockSpec((1, row_tile), lambda i: (0, i)),
        ),
        compiler_params=pltpu.CompilerParams(
            dimension_semantics=("parallel",),
            vmem_limit_bytes=_VMEM_LIMIT_BYTES),
    )(p2, t2)
    return rowwise.reshape(lead_shape).astype(out_dtype)


# ------------------------------------------------------------------
# Demo / self-check
# ------------------------------------------------------------------
if __name__ == "__main__":
    key = jax.random.PRNGKey(0)
    kp, kt, kp2, kt2, kp3, kt3 = jax.random.split(key, 6)

    # pred/target: (batch=2, seq=8, hidden=32)
    pred = jax.random.normal(kp, (2, 8, 32), dtype=jnp.float32)
    target = jax.random.normal(kt, (2, 8, 32), dtype=jnp.float32)

    loss_mean = final_prediction_l1_loss(pred, target, reduction="mean")
    loss_sum = final_prediction_l1_loss(pred, target, reduction="sum")
    loss_none = final_prediction_l1_loss(pred, target, reduction="none")
    jax.block_until_ready((loss_mean, loss_sum, loss_none))

    # Pure-JAX reference (mirrors the PyTorch forward)
    ref_rows = jnp.abs(pred[:, :] - target).sum(axis=-1)
    assert np.allclose(np.asarray(loss_mean), np.asarray(ref_rows.mean()),
                       rtol=1e-5, atol=1e-5)
    assert np.allclose(np.asarray(loss_sum), np.asarray(ref_rows.sum()),
                       rtol=1e-5, atol=1e-5)
    assert np.allclose(np.asarray(loss_none), np.asarray(ref_rows),
                       rtol=1e-5, atol=1e-5)

    # Extra checks with a tiny block size to exercise multi-step grids,
    # accumulator init/finalize and partial-last-block handling.
    pred2 = jax.random.normal(kp2, (5, 8, 32), dtype=jnp.float32)
    target2 = jax.random.normal(kt2, (5, 8, 32), dtype=jnp.float32)
    s2 = final_prediction_l1_loss(pred2, target2, reduction="sum",
                                  block_elems=1024)
    ref2 = jnp.abs(pred2 - target2).sum(axis=-1).sum()
    assert np.allclose(np.asarray(s2), np.asarray(ref2), rtol=1e-5, atol=1e-4)

    pred3 = jax.random.normal(kp3, (10, 20, 32), dtype=jnp.float32)
    target3 = jax.random.normal(kt3, (10, 20, 32), dtype=jnp.float32)
    n3 = final_prediction_l1_loss(pred3, target3, reduction="none",
                                  block_elems=1024)
    ref3 = jnp.abs(pred3 - target3).sum(axis=-1)
    assert np.allclose(np.asarray(n3), np.asarray(ref3), rtol=1e-5, atol=1e-4)

    jax.block_until_ready((s2, n3))
    print("KERNEL_OK")
</pallas_src>

<mosaic_0001>
module attributes {stable_mosaic.version = 11 : i64} {
  func.func @_l1_reduce_kernel(%arg0: i32, %arg1: memref<4x128xf32, #tpu.memory_space<vmem>>, %arg2: memref<4x128xf32, #tpu.memory_space<vmem>>, %arg3: memref<1x1xf32, #tpu.memory_space<smem>>, %arg4: memref<4x128xf32, #tpu.memory_space<vmem>>) attributes {dimension_semantics = [#tpu.dimension_semantics<arbitrary>], iteration_bounds = array<i64: 1>, scalar_prefetch = 0 : i64, scratch_operands = 1 : i64, tpu.core_type = #tpu.core_type<tc>, window_params = [{transform_indices = @transform_0, window_bounds = array<i64: 4, 128>}, {transform_indices = @transform_1, window_bounds = array<i64: 4, 128>}, {transform_indices = @transform_2, window_bounds = array<i64: 1, 1>}]} {
    %c0_i32 = arith.constant 0 : i32
    %0 = arith.cmpi eq, %arg0, %c0_i32 : i32
    %1 = arith.extui %0 : i1 to i32
    %c0_i32_0 = arith.constant 0 : i32
    %2 = arith.cmpi ne, %1, %c0_i32_0 : i32
    scf.if %2 {
      %cst = arith.constant 0.000000e+00 : f32
      %13 = vector.broadcast %cst : f32 to vector<4x128xf32>
      %c0_10 = arith.constant 0 : index
      %c0_11 = arith.constant 0 : index
      %14 = vector.load %arg4[%c0_10, %c0_11] : memref<4x128xf32, #tpu.memory_space<vmem>>, vector<4x128xf32>
      tpu.vector_store %arg4[%c0_10, %c0_11], %13 {strides = array<i32>} : memref<4x128xf32, #tpu.memory_space<vmem>>, vector<4x128xf32>,
    } else {
    }
    %c0 = arith.constant 0 : index
    %c0_1 = arith.constant 0 : index
    %3 = vector.load %arg1[%c0, %c0_1] : memref<4x128xf32, #tpu.memory_space<vmem>>, vector<4x128xf32>
    %c0_2 = arith.constant 0 : index
    %c0_3 = arith.constant 0 : index
    %4 = vector.load %arg2[%c0_2, %c0_3] : memref<4x128xf32, #tpu.memory_space<vmem>>, vector<4x128xf32>
    %5 = arith.subf %3, %4 : vector<4x128xf32>
    %6 = math.absf %5 : vector<4x128xf32>
    %c0_4 = arith.constant 0 : index
    %c0_5 = arith.constant 0 : index
    %7 = vector.load %arg4[%c0_4, %c0_5] : memref<4x128xf32, #tpu.memory_space<vmem>>, vector<4x128xf32>
    %8 = arith.addf %7, %6 : vector<4x128xf32>
    %c0_6 = arith.constant 0 : index
    %c0_7 = arith.constant 0 : index
    %9 = vector.load %arg4[%c0_6, %c0_7] : memref<4x128xf32, #tpu.memory_space<vmem>>, vector<4x128xf32>
    tpu.vector_store %arg4[%c0_6, %c0_7], %8 {strides = array<i32>} : memref<4x128xf32, #tpu.memory_space<vmem>>, vector<4x128xf32>,
    %c0_i32_8 = arith.constant 0 : i32
    %10 = arith.cmpi eq, %arg0, %c0_i32_8 : i32
    %11 = arith.extui %10 : i1 to i32
    %c0_i32_9 = arith.constant 0 : i32
    %12 = arith.cmpi ne, %11, %c0_i32_9 : i32
    scf.if %12 {
      %c0_10 = arith.constant 0 : index
      %c0_11 = arith.constant 0 : index
      %13 = vector.load %arg4[%c0_10, %c0_11] : memref<4x128xf32, #tpu.memory_space<vmem>>, vector<4x128xf32>
      %14 = vector.shape_cast %13 : vector<4x128xf32> to vector<1x4x128xf32>
      %cst = arith.constant dense<0.000000e+00> : vector<1xf32>
      %15 = vector.multi_reduction <add>, %14, %cst [1, 2] : vector<1x4x128xf32> to vector<1xf32>
      %16 = vector.shape_cast %15 : vector<1xf32> to vector<1x1x1xf32>
      %17 = vector.extract %16[0, 0, 0] : f32 from vector<1x1x1xf32>
      %c0_12 = arith.constant 0 : index
      %c0_13 = arith.constant 0 : index
      %18 = memref.load %arg3[%c0_12, %c0_13] : memref<1x1xf32, #tpu.memory_space<smem>>
      memref.store %17, %arg3[%c0_12, %c0_13] : memref<1x1xf32, #tpu.memory_space<smem>>
    } else {
    }
    return
  }
  func.func @transform_0(%arg0: i32) -> (i32, i32) {
    %c0_i32 = arith.constant 0 : i32
    %c0_i32_0 = arith.constant 0 : i32
    return %arg0, %c0_i32 : i32, i32
  }
  func.func @transform_1(%arg0: i32) -> (i32, i32) {
    %c0_i32 = arith.constant 0 : i32
    %c0_i32_0 = arith.constant 0 : i32
    return %arg0, %c0_i32 : i32, i32
  }
  func.func @transform_2(%arg0: i32) -> (i32, i32) {
    %c0_i32 = arith.constant 0 : i32
    %c0_i32_0 = arith.constant 0 : i32
    %c0_i32_1 = arith.constant 0 : i32
    return %c0_i32, %c0_i32_0 : i32, i32
  }
}

</mosaic_0001>

<llo_original>
// kernel: final_prediction_l1_loss.1
$region0: #{final_prediction_l1_loss.1}
  #allocation0 [shape = 'u32[]', space=smem, size = 0x4, offset = 0x4, fixed_abs, tag = 'smem constant byte address 0x4 - core index']
  #allocation1 [shape = 'u32[72,128]{1,0:T(1,128)}', space=vmem, size = 0x9000, scoped, tag = 'internal scratch']
  #allocation2 [shape = 'f32[4,128]{1,0:T(4,128)}', space=vmem, size = 0x800, scoped, tag = 'scratch operand']
  %s0 = inlined_call_operand.vmem [shape: f32[4,128], index: 0, kind: input, shape index: {}]
  %s1 = inlined_call_operand.vmem [shape: f32[4,128], index: 1, kind: input, shape index: {}]
  %s2 = inlined_call_operand.hbm [shape: f32[1,1], index: 2, kind: output, shape index: {}]
  %s3 = sld [smem:[#allocation0]]
  $region26: #{final_prediction_l1_loss.1} parent=0
    _
  %s5 = ssub.s32 1, %s3
  %s6 = scalar_select 0, %s5, %s3
  $region1: #{final_prediction_l1_loss.1} parent=0
    #allocation3 [shape = 'u8[512]{0}', space=smem, size = 0x200, scoped, tag = 'output window, operand 0, single buffered']
    #allocation4 [shape = 's32[1]{0}', space=sflag, size = 0x4, scoped, tag = 'scoped memory for final_prediction_l1_loss.1']
    %7 = vsyncpa [#allocation4], 0
    // Predicated region
    $region2: #{final_prediction_l1_loss.1} parent=1 // pred_check
      _
    $region3: #{final_prediction_l1_loss.1} parent=1 // pred_check_branch
      %9 = sbr.rel (0) target = $region5
    $region4: #{final_prediction_l1_loss.1} parent=1 // pred_region
      _
    $region5: #{final_prediction_l1_loss.1} parent=1 // pred_fallthru
      _
    // Predicated region
    $region6: #{final_prediction_l1_loss.1} parent=1 // pred_check
      _
    $region7: #{final_prediction_l1_loss.1} parent=1 // pred_check_branch
      %11 = sbr.rel (0) target = $region9
    $region8: #{final_prediction_l1_loss.1} parent=1 // pred_region
      _
    $region9: #{final_prediction_l1_loss.1} parent=1 // pred_fallthru
      _
    %p12 = scmp.eq.s32.totalorder 0, 0
    // Predicated region
    $region10: #{final_prediction_l1_loss.1} parent=1 // pred_check
      %p13 = pneg %p12
    $region11: #{final_prediction_l1_loss.1} parent=1 // pred_check_branch
      %15 = sbr.rel (%p13) target = $region13
    $region12: #{final_prediction_l1_loss.1} parent=1 // pred_region
      %16 = vst [vmem:[#allocation2] sm:$0xf] 0.0
    $region13: #{final_prediction_l1_loss.1} parent=1 // pred_fallthru
      _
    %v17 = vld [vmem:[%s0] sm:$0xf]
    %v18 = vld [vmem:[%s1] sm:$0xf]
    %v19 = vsub.f32 %v17, %v18
    %v20 = vand.u32 2147483647, %v19
    %v21 = vld [vmem:[#allocation2] sm:$0xf]
    %v22 = vadd.f32 %v21, %v20
    %23 = vst [vmem:[#allocation2] sm:$0xf] %v22
    // Predicated region
    $region14: #{final_prediction_l1_loss.1} parent=1 // pred_check
      %p24 = pneg %p12
    $region15: #{final_prediction_l1_loss.1} parent=1 // pred_check_branch
      %26 = sbr.rel (%p24) target = $region17
    $region16: #{final_prediction_l1_loss.1} parent=1 // pred_region
      %v27 = vld [vmem:[#allocation2] sm:$0xf]
      %vm28 = vcmask 1043456
      %v29 = vsel %vm28, %v27, 0.0
      %30 = vadd.xlane.f32.xlu0 %v29
      %v31 = vpop.xlane.xlu0 %30
      %v32 = vrot.slane %v31, 4
      %v33 = vadd.f32 %v31, %v32
      %v34 = vrot.slane %v33, 2
      %v35 = vadd.f32 %v33, %v34
      %v36 = vrot.slane %v35, 1
      %v37 = vadd.f32 %v35, %v36
      %s38 = vtos %v37
      %s39 = scalar_lea.smem [#allocation3], 0
      %40 = sst [smem:[%s39]] %s38
    $region17: #{final_prediction_l1_loss.1} parent=1 // pred_fallthru
      _
    // Predicated region
    $region18: #{final_prediction_l1_loss.1} parent=1 // pred_check
      _
    $region19: #{final_prediction_l1_loss.1} parent=1 // pred_check_branch
      %42 = sbr.rel (0) target = $region21
    $region20: #{final_prediction_l1_loss.1} parent=1 // pred_region
      %44 = vsyncadd [#allocation4], 0
      %s46 = sshll.u32 %s2, 4
      %s47 = int_to_ptr.hbm [resolvable:$true] %s46
      %49 = dma.smem_to_hbm [#allocation3], 16, %s47, [#allocation4]
    $region21: #{final_prediction_l1_loss.1} parent=1 // pred_fallthru
      _
    // Predicated region
    $region22: #{final_prediction_l1_loss.1} parent=1 // pred_check
      _
    $region23: #{final_prediction_l1_loss.1} parent=1 // pred_check_branch
      %51 = sbr.rel (0) target = $region25
    $region24: #{final_prediction_l1_loss.1} parent=1 // pred_region
      %53 = dma.done [#allocation4], 16
    $region25: #{final_prediction_l1_loss.1} parent=1 // pred_fallthru
      _
    %54 = sfence
    %55 = vsyncpa [#allocation4], 1

</llo_original>
